<compile_context>
chip_gen: v7x
topology: tpu7x:2x2x1
jax: 0.10.0
libtpu: 0.0.40
codegen_flags: <defaults>
</compile_context>

<pallas_src>
import functools

import jax
import jax.numpy as jnp
from jax.experimental import pallas as pl
from jax.experimental.pallas import tpu as pltpu

EPS = 1e-5
LANE = 128


def _round_up(n, m):
    return ((n + m - 1) // m) * m


# ---------------------------------------------------------------------------
# Per-generation sizing (v5e/v6e: 128 MiB VMEM -> bigger tiles; v7x: 64 MiB).
# ---------------------------------------------------------------------------
def _tpu_defaults():
    try:
        cap = int(pltpu.get_tpu_info().vmem_capacity_bytes)
    except Exception:
        cap = 64 * 1024 * 1024            # conservative fallback (v7x per-TC)
    if cap > 64 * 1024 * 1024:            # v5e / v6e class (128 MiB physical)
        return 100 * 1024 * 1024, 1024
    return 48 * 1024 * 1024, 512          # v7x class


_VMEM_LIMIT, _MAX_TILE = _tpu_defaults()


# ---------------------------------------------------------------------------
# Single-buffering for constant-index (resident) blocks.  Feature-probed once
# so a jax build that rejects Buffered(1) falls back to default buffering
# instead of failing the real kernels.
# ---------------------------------------------------------------------------
def _supports_single_buffering():
    try:
        def _k(x_ref, o_ref):
            o_ref[...] = x_ref[...]

        probe = pl.pallas_call(
            _k,
            grid=(2,),
            in_specs=[pl.BlockSpec((8, LANE), lambda i: (0, 0),
                                   pipeline_mode=pl.Buffered(1))],
            out_specs=pl.BlockSpec((8, LANE), lambda i: (0, i)),
            out_shape=jax.ShapeDtypeStruct((8, 2 * LANE), jnp.float32),
        )
        jax.block_until_ready(probe(jnp.zeros((8, LANE), jnp.float32)))
        return True
    except Exception:
        return False


_SINGLE_BUFFER_OK = _supports_single_buffering()


def _resident_spec(block_shape, index_map):
    """BlockSpec for a block whose index_map is constant across the grid."""
    if _SINGLE_BUFFER_OK:
        return pl.BlockSpec(block_shape, index_map, pipeline_mode=pl.Buffered(1))
    return pl.BlockSpec(block_shape, index_map)


# ---------------------------------------------------------------------------
# Tiling helpers: never fall back to 128-wide tiles.  Feature dims are padded
# so the padded dim splits into tiles >= 256 lanes (or a single tile).
# ---------------------------------------------------------------------------
def _padded_dim(dim, max_tile):
    dim_lane = _round_up(dim, LANE)
    if dim_lane <= max_tile:
        return dim_lane                   # single full-width tile
    best = None
    t = max_tile
    while t >= 2 * LANE:                  # consider tiles >= 256, multiples of 128
        pad = _round_up(dim_lane, t)
        if best is None or pad < best:
            best = pad
        t -= LANE
    return best


def _pick_tile(dim_padded, max_tile):
    """Largest multiple-of-128 divisor of dim_padded that is <= max_tile."""
    t = min(max_tile, dim_padded)
    t -= t % LANE
    while dim_padded % t:
        t -= LANE
    return t


# ---------------------------------------------------------------------------
# Kernels
# ---------------------------------------------------------------------------
def _bn_train(h, gamma, beta):
    """PyTorch training-mode BatchNorm1d (batch stats, biased var), one-pass."""
    mu = jnp.mean(h, axis=0, keepdims=True)
    var = jnp.maximum(jnp.mean(h * h, axis=0, keepdims=True) - mu * mu, 0.0)
    return gamma * (h - mu) * jax.lax.rsqrt(var + EPS) + beta


def _fused_kernel(x_ref, we_t_ref, be_ref, ge_ref, bte_ref,
                  wd_t_ref, bd_ref, gd_ref, btd_ref,
                  y_ref, loss_ref, *, inv_count):
    """Whole forward in one call (both padded feature dims fit in one tile)."""
    x = x_ref[...]                                                # (B, Din_p) f32
    h = jnp.dot(x.astype(jnp.bfloat16), we_t_ref[...],
                preferred_element_type=jnp.float32) + be_ref[...]
    y = _bn_train(h, ge_ref[...], bte_ref[...])
    y_ref[...] = y
    g = jnp.dot(y.astype(jnp.bfloat16), wd_t_ref[...],
                preferred_element_type=jnp.float32) + bd_ref[...]
    x_rec = _bn_train(g, gd_ref[...], btd_ref[...])
    diff = x_rec - x
    loss_ref[...] = jnp.reshape(jnp.sum(diff * diff) * inv_count, (1, 1))


def _encoder_kernel(x_ref, we_t_ref, be_ref, ge_ref, bte_ref, y_ref):
    """One Dout tile of  y = BN_train(x @ We^T + be)."""
    h = jnp.dot(x_ref[...].astype(jnp.bfloat16), we_t_ref[...],
                preferred_element_type=jnp.float32) + be_ref[...]
    y_ref[...] = _bn_train(h, ge_ref[...], bte_ref[...])


def _decoder_loss_kernel(y_ref, wd_t_ref, bd_ref, gd_ref, btd_ref, x_ref,
                         part_ref):
    """One Din tile of x_rec = BN_train(y @ Wd^T + bd); emit per-tile SSE."""
    g = jnp.dot(y_ref[...].astype(jnp.bfloat16), wd_t_ref[...],
                preferred_element_type=jnp.float32) + bd_ref[...]
    x_rec = _bn_train(g, gd_ref[...], btd_ref[...])
    diff = x_rec - x_ref[...]
    part_ref[...] = jnp.full((1, LANE), jnp.sum(diff * diff), dtype=jnp.float32)


# ---------------------------------------------------------------------------
# Wrappers
# ---------------------------------------------------------------------------
def prepare_params(params, max_tile=_MAX_TILE):
    """One-time padding / transpose / cast of PyTorch-shaped parameters.

    Weights become lane-dense (feature dims padded to a multiple of the chosen
    tile), pre-transposed to (in, out) and cast to bf16; biases / BN affine
    params become (1, D_pad) f32 rows.  Zero padding keeps the math exact.
    """
    dout, din = params["we"].shape
    din_p = _padded_dim(din, max_tile)
    dout_p = _padded_dim(dout, max_tile)

    def pad2(a, rows, cols):
        return jnp.pad(a, ((0, rows - a.shape[0]), (0, cols - a.shape[1])))

    def pad_row(a, cols):
        return jnp.pad(a, (0, cols - a.shape[0])).reshape(1, cols).astype(jnp.float32)

    return {
        "we_t": pad2(params["we"].T, din_p, dout_p).astype(jnp.bfloat16),
        "be": pad_row(params["be"], dout_p),
        "gamma_e": pad_row(params["gamma_e"], dout_p),
        "beta_e": pad_row(params["beta_e"], dout_p),
        "wd_t": pad2(params["wd"].T, dout_p, din_p).astype(jnp.bfloat16),
        "bd": pad_row(params["bd"], din_p),
        "gamma_d": pad_row(params["gamma_d"], din_p),
        "beta_d": pad_row(params["beta_d"], din_p),
    }


@functools.partial(jax.jit,
                   static_argnames=("output_dim", "max_tile", "vmem_limit"))
def linear_autoencoder_forward(x, prepared, *, output_dim,
                               max_tile=_MAX_TILE, vmem_limit=_VMEM_LIMIT):
    """Training-mode forward with is_reconstruct=True: returns (y, loss)."""
    B, din = x.shape
    din_p = prepared["bd"].shape[1]
    dout_p = prepared["be"].shape[1]

    # Single padded f32 copy of x (reused by the loss); bf16 casts for the MXU
    # happen inside the kernels.  Padded columns are exactly zero everywhere.
    x_p = jnp.pad(x.astype(jnp.float32), ((0, 0), (0, din_p - din)))
    inv_count = 1.0 / float(B * din)

    # ---- fully fused path: both padded feature dims fit in a single tile ----
    if din_p <= max_tile and dout_p <= max_tile:
        cost = pl.CostEstimate(
            flops=4 * B * din_p * dout_p + 12 * B * (din_p + dout_p),
            transcendentals=din_p + dout_p,
            bytes_accessed=(B * din_p * 4 + 2 * din_p * dout_p * 2
                            + 3 * (din_p + dout_p) * 4 + B * dout_p * 4 + 4))
        y_p, loss = pl.pallas_call(
            functools.partial(_fused_kernel, inv_count=inv_count),
            out_shape=[jax.ShapeDtypeStruct((B, dout_p), jnp.float32),
                       jax.ShapeDtypeStruct((1, 1), jnp.float32)],
            compiler_params=pltpu.CompilerParams(vmem_limit_bytes=vmem_limit),
            cost_estimate=cost,
        )(x_p, prepared["we_t"], prepared["be"], prepared["gamma_e"],
          prepared["beta_e"], prepared["wd_t"], prepared["bd"],
          prepared["gamma_d"], prepared["beta_d"])
        return y_p[:, :output_dim], loss[0, 0]

    # ---- tiled path: encoder over Dout tiles, decoder+loss over Din tiles ----
    tn_e = _pick_tile(dout_p, max_tile)
    tn_d = _pick_tile(din_p, max_tile)
    n_e = dout_p // tn_e
    n_d = din_p // tn_d

    enc_cost = pl.CostEstimate(
        flops=2 * B * din_p * dout_p + 10 * B * dout_p,
        transcendentals=dout_p,
        bytes_accessed=(B * din_p * 4 + din_p * dout_p * 2
                        + 3 * dout_p * 4 + B * dout_p * 4))
    y_p = pl.pallas_call(
        _encoder_kernel,
        grid=(n_e,),
        in_specs=[
            _resident_spec((B, din_p), lambda j: (0, 0)),      # x (f32), resident
            pl.BlockSpec((din_p, tn_e), lambda j: (0, j)),     # We^T tile (bf16)
            pl.BlockSpec((1, tn_e), lambda j: (0, j)),         # be
            pl.BlockSpec((1, tn_e), lambda j: (0, j)),         # gamma_e
            pl.BlockSpec((1, tn_e), lambda j: (0, j)),         # beta_e
        ],
        out_specs=pl.BlockSpec((B, tn_e), lambda j: (0, j)),   # y (f32)
        out_shape=jax.ShapeDtypeStruct((B, dout_p), jnp.float32),
        compiler_params=pltpu.CompilerParams(
            dimension_semantics=("parallel",),
            vmem_limit_bytes=vmem_limit),
        cost_estimate=enc_cost,
    )(x_p, prepared["we_t"], prepared["be"], prepared["gamma_e"],
      prepared["beta_e"])

    dec_cost = pl.CostEstimate(
        flops=2 * B * dout_p * din_p + 13 * B * din_p,
        transcendentals=din_p,
        bytes_accessed=(B * dout_p * 4 + dout_p * din_p * 2
                        + 3 * din_p * 4 + B * din_p * 4 + n_d * LANE * 4))
    partials = pl.pallas_call(
        _decoder_loss_kernel,
        grid=(n_d,),
        in_specs=[
            _resident_spec((B, dout_p), lambda j: (0, 0)),     # y (f32), resident
            pl.BlockSpec((dout_p, tn_d), lambda j: (0, j)),    # Wd^T tile (bf16)
            pl.BlockSpec((1, tn_d), lambda j: (0, j)),         # bd
            pl.BlockSpec((1, tn_d), lambda j: (0, j)),         # gamma_d
            pl.BlockSpec((1, tn_d), lambda j: (0, j)),         # beta_d
            pl.BlockSpec((B, tn_d), lambda j: (0, j)),         # x tile (f32, loss)
        ],
        out_specs=pl.BlockSpec((1, LANE), lambda j: (j, 0)),   # per-tile SSE
        out_shape=jax.ShapeDtypeStruct((n_d, LANE), jnp.float32),
        compiler_params=pltpu.CompilerParams(
            dimension_semantics=("parallel",),                 # both v7x TCs
            vmem_limit_bytes=vmem_limit),
        cost_estimate=dec_cost,
    )(y_p, prepared["wd_t"], prepared["bd"], prepared["gamma_d"],
      prepared["beta_d"], x_p)

    loss = jnp.sum(partials[:, 0]) * inv_count
    return y_p[:, :output_dim], loss


# ---------------------------------------------------------------------------
# Reference + params
# ---------------------------------------------------------------------------
def _reference_forward(x, params):
    """Pure-JAX reference mirroring the kernel precision policy (bf16 matmul
    inputs, f32 accumulation / BN / loss; PyTorch training-mode BatchNorm)."""
    xb = x.astype(jnp.bfloat16)
    web = params["we"].astype(jnp.bfloat16)
    h = jnp.dot(xb, web.T, preferred_element_type=jnp.float32) + params["be"]
    mu = jnp.mean(h, axis=0)
    var = jnp.mean((h - mu) ** 2, axis=0)
    y = params["gamma_e"] * (h - mu) / jnp.sqrt(var + EPS) + params["beta_e"]

    yb = y.astype(jnp.bfloat16)
    wdb = params["wd"].astype(jnp.bfloat16)
    g = jnp.dot(yb, wdb.T, preferred_element_type=jnp.float32) + params["bd"]
    mu2 = jnp.mean(g, axis=0)
    var2 = jnp.mean((g - mu2) ** 2, axis=0)
    x_rec = params["gamma_d"] * (g - mu2) / jnp.sqrt(var2 + EPS) + params["beta_d"]

    loss = jnp.mean((x_rec - x) ** 2)
    return y, loss


def init_params(key, input_dim, output_dim):
    k1, k2, k3, k4 = jax.random.split(key, 4)
    # PyTorch-shaped parameters (nn.Linear weight is (out, in)).
    bound_e = 1.0 / jnp.sqrt(input_dim)
    bound_d = 1.0 / jnp.sqrt(output_dim)
    return {
        "we": jax.random.uniform(k1, (output_dim, input_dim), jnp.float32,
                                 -bound_e, bound_e),
        "be": jax.random.uniform(k2, (output_dim,), jnp.float32, -bound_e, bound_e),
        "gamma_e": jnp.ones((output_dim,), jnp.float32),
        "beta_e": jnp.zeros((output_dim,), jnp.float32),
        "wd": jax.random.uniform(k3, (input_dim, output_dim), jnp.float32,
                                 -bound_d, bound_d),
        "bd": jax.random.uniform(k4, (input_dim,), jnp.float32, -bound_d, bound_d),
        "gamma_d": jnp.ones((input_dim,), jnp.float32),
        "beta_d": jnp.zeros((input_dim,), jnp.float32),
    }


if __name__ == "__main__":
    key = jax.random.PRNGKey(0)
    kx, kp, kx2, kp2 = jax.random.split(key, 4)

    # ---- small test: fused single-tile path (B multiple of 8) ----
    B, INPUT_DIM, OUTPUT_DIM = 8, 32, 16
    x = jax.random.normal(kx, (B, INPUT_DIM), jnp.float32)
    params = init_params(kp, INPUT_DIM, OUTPUT_DIM)
    prepared = prepare_params(params)                 # one-time pad / cast
    y, loss = linear_autoencoder_forward(x, prepared, output_dim=OUTPUT_DIM)
    y, loss = jax.block_until_ready((y, loss))
    y_ref, loss_ref = _reference_forward(x, params)
    assert y.shape == (B, OUTPUT_DIM)
    assert jnp.allclose(y, y_ref, atol=2e-3, rtol=2e-3), "encoded mismatch (fused)"
    assert jnp.allclose(loss, loss_ref, atol=2e-3, rtol=2e-3), "loss mismatch (fused)"

    # ---- larger test: multi-tile encoder / decoder + parallel partial-loss ----
    B2, IN2, OUT2 = 32, 1152, 1280
    x2 = jax.random.normal(kx2, (B2, IN2), jnp.float32)
    params2 = init_params(kp2, IN2, OUT2)
    prepared2 = prepare_params(params2)
    y2, loss2 = linear_autoencoder_forward(x2, prepared2, output_dim=OUT2)
    y2, loss2 = jax.block_until_ready((y2, loss2))
    y2_ref, loss2_ref = _reference_forward(x2, params2)
    assert y2.shape == (B2, OUT2)
    assert jnp.allclose(y2, y2_ref, atol=5e-3, rtol=5e-3), "encoded mismatch (tiled)"
    assert jnp.allclose(loss2, loss2_ref, atol=5e-3, rtol=5e-3), "loss mismatch (tiled)"

    print("KERNEL_OK")
</pallas_src>

<mosaic_0001>
module attributes {stable_mosaic.version = 11 : i64} {
  func.func @_k(%arg0: i32, %arg1: memref<8x128xf32, #tpu.memory_space<vmem>>, %arg2: memref<8x128xf32, #tpu.memory_space<vmem>>) attributes {dimension_semantics = [#tpu.dimension_semantics<arbitrary>], iteration_bounds = array<i64: 2>, scalar_prefetch = 0 : i64, scratch_operands = 0 : i64, tpu.core_type = #tpu.core_type<tc>, window_params = [{pipeline_mode = #tpu.pipeline_mode<synchronous>, transform_indices = @transform_0, window_bounds = array<i64: 8, 128>}, {transform_indices = @transform_1, window_bounds = array<i64: 8, 128>}]} {
    %c0 = arith.constant 0 : index
    %c0_0 = arith.constant 0 : index
    %0 = vector.load %arg1[%c0, %c0_0] : memref<8x128xf32, #tpu.memory_space<vmem>>, vector<8x128xf32>
    %c0_1 = arith.constant 0 : index
    %c0_2 = arith.constant 0 : index
    %1 = vector.load %arg2[%c0_1, %c0_2] : memref<8x128xf32, #tpu.memory_space<vmem>>, vector<8x128xf32>
    tpu.vector_store %arg2[%c0_1, %c0_2], %0 {strides = array<i32>} : memref<8x128xf32, #tpu.memory_space<vmem>>, vector<8x128xf32>,
    return
  }
  func.func @transform_0(%arg0: i32) -> (i32, i32) {
    %c0_i32 = arith.constant 0 : i32
    %c0_i32_0 = arith.constant 0 : i32
    %c0_i32_1 = arith.constant 0 : i32
    return %c0_i32, %c0_i32_0 : i32, i32
  }
  func.func @transform_1(%arg0: i32) -> (i32, i32) {
    %c0_i32 = arith.constant 0 : i32
    %c0_i32_0 = arith.constant 0 : i32
    return %c0_i32, %arg0 : i32, i32
  }
}

module attributes {stable_mosaic.version = 11 : i64} {
  func.func @_fused_kernel(%arg0: memref<8x128xf32, #tpu.memory_space<vmem>>, %arg1: memref<128x128xbf16, #tpu.memory_space<vmem>>, %arg2: memref<1x128xf32, #tpu.memory_space<vmem>>, %arg3: memref<1x128xf32, #tpu.memory_space<vmem>>, %arg4: memref<1x128xf32, #tpu.memory_space<vmem>>, %arg5: memref<128x128xbf16, #tpu.memory_space<vmem>>, %arg6: memref<1x128xf32, #tpu.memory_space<vmem>>, %arg7: memref<1x128xf32, #tpu.memory_space<vmem>>, %arg8: memref<1x128xf32, #tpu.memory_space<vmem>>, %arg9: memref<8x128xf32, #tpu.memory_space<vmem>>, %arg10: memref<1x1xf32, #tpu.memory_space<vmem>>) attributes {dimension_semantics = [], scalar_prefetch = 0 : i64, scratch_operands = 0 : i64, tpu.core_type = #tpu.core_type<tc>} {
    %c0 = arith.constant 0 : index
    %c0_0 = arith.constant 0 : index
    %0 = vector.load %arg0[%c0, %c0_0] : memref<8x128xf32, #tpu.memory_space<vmem>>, vector<8x128xf32>
    %1 = arith.truncf %0 : vector<8x128xf32> to vector<8x128xbf16>
    %c0_1 = arith.constant 0 : index
    %c0_2 = arith.constant 0 : index
    %2 = vector.load %arg1[%c0_1, %c0_2] : memref<128x128xbf16, #tpu.memory_space<vmem>>, vector<128x128xbf16>
    %cst = arith.constant dense<0.000000e+00> : vector<8x128xf32>
    %3 = tpu.matmul %1, %2, %cst {dimension_numbers = #tpu.dot_dimension_numbers<[1], [0], [0], [1], [0, 0, 1, 1], [], []>} : vector<8x128xbf16>, vector<128x128xbf16>, vector<8x128xf32> -> vector<8x128xf32>
    %c0_3 = arith.constant 0 : index
    %c0_4 = arith.constant 0 : index
    %4 = vector.load %arg2[%c0_3, %c0_4] : memref<1x128xf32, #tpu.memory_space<vmem>>, vector<1x128xf32>
    %5 = vector.broadcast %4 : vector<1x128xf32> to vector<8x128xf32>
    %6 = arith.addf %3, %5 : vector<8x128xf32>
    %c0_5 = arith.constant 0 : index
    %c0_6 = arith.constant 0 : index
    %7 = vector.load %arg3[%c0_5, %c0_6] : memref<1x128xf32, #tpu.memory_space<vmem>>, vector<1x128xf32>
    %c0_7 = arith.constant 0 : index
    %c0_8 = arith.constant 0 : index
    %8 = vector.load %arg4[%c0_7, %c0_8] : memref<1x128xf32, #tpu.memory_space<vmem>>, vector<1x128xf32>
    %cst_9 = arith.constant dense<0.000000e+00> : vector<128xf32>
    %9 = vector.multi_reduction <add>, %6, %cst_9 [0] : vector<8x128xf32> to vector<128xf32>
    %10 = vector.shape_cast %9 : vector<128xf32> to vector<1x128xf32>
    %cst_10 = arith.constant 8.000000e+00 : f32
    %11 = vector.broadcast %cst_10 : f32 to vector<1x128xf32>
    %12 = arith.divf %10, %11 : vector<1x128xf32>
    %13 = arith.mulf %6, %6 : vector<8x128xf32>
    %cst_11 = arith.constant dense<0.000000e+00> : vector<128xf32>
    %14 = vector.multi_reduction <add>, %13, %cst_11 [0] : vector<8x128xf32> to vector<128xf32>
    %15 = vector.shape_cast %14 : vector<128xf32> to vector<1x128xf32>
    %cst_12 = arith.constant 8.000000e+00 : f32
    %16 = vector.broadcast %cst_12 : f32 to vector<1x128xf32>
    %17 = arith.divf %15, %16 : vector<1x128xf32>
    %18 = arith.mulf %12, %12 : vector<1x128xf32>
    %19 = arith.subf %17, %18 : vector<1x128xf32>
    %cst_13 = arith.constant 0.000000e+00 : f32
    %20 = vector.broadcast %cst_13 : f32 to vector<1x128xf32>
    %21 = arith.maximumf %19, %20 : vector<1x128xf32>
    %22 = vector.broadcast %12 : vector<1x128xf32> to vector<8x128xf32>
    %23 = arith.subf %6, %22 : vector<8x128xf32>
    %24 = vector.broadcast %7 : vector<1x128xf32> to vector<8x128xf32>
    %25 = arith.mulf %24, %23 : vector<8x128xf32>
    %cst_14 = arith.constant 9.99999974E-6 : f32
    %26 = vector.broadcast %cst_14 : f32 to vector<1x128xf32>
    %27 = arith.addf %21, %26 : vector<1x128xf32>
    %28 = math.rsqrt %27 : vector<1x128xf32>
    %29 = vector.broadcast %28 : vector<1x128xf32> to vector<8x128xf32>
    %30 = arith.mulf %25, %29 : vector<8x128xf32>
    %31 = vector.broadcast %8 : vector<1x128xf32> to vector<8x128xf32>
    %32 = arith.addf %30, %31 : vector<8x128xf32>
    %c0_15 = arith.constant 0 : index
    %c0_16 = arith.constant 0 : index
    %33 = vector.load %arg9[%c0_15, %c0_16] : memref<8x128xf32, #tpu.memory_space<vmem>>, vector<8x128xf32>
    tpu.vector_store %arg9[%c0_15, %c0_16], %32 {strides = array<i32>} : memref<8x128xf32, #tpu.memory_space<vmem>>, vector<8x128xf32>,
    %34 = arith.truncf %32 : vector<8x128xf32> to vector<8x128xbf16>
    %c0_17 = arith.constant 0 : index
    %c0_18 = arith.constant 0 : index
    %35 = vector.load %arg5[%c0_17, %c0_18] : memref<128x128xbf16, #tpu.memory_space<vmem>>, vector<128x128xbf16>
    %cst_19 = arith.constant dense<0.000000e+00> : vector<8x128xf32>
    %36 = tpu.matmul %34, %35, %cst_19 {dimension_numbers = #tpu.dot_dimension_numbers<[1], [0], [0], [1], [0, 0, 1, 1], [], []>} : vector<8x128xbf16>, vector<128x128xbf16>, vector<8x128xf32> -> vector<8x128xf32>
    %c0_20 = arith.constant 0 : index
    %c0_21 = arith.constant 0 : index
    %37 = vector.load %arg6[%c0_20, %c0_21] : memref<1x128xf32, #tpu.memory_space<vmem>>, vector<1x128xf32>
    %38 = vector.broadcast %37 : vector<1x128xf32> to vector<8x128xf32>
    %39 = arith.addf %36, %38 : vector<8x128xf32>
    %c0_22 = arith.constant 0 : index
    %c0_23 = arith.constant 0 : index
    %40 = vector.load %arg7[%c0_22, %c0_23] : memref<1x128xf32, #tpu.memory_space<vmem>>, vector<1x128xf32>
    %c0_24 = arith.constant 0 : index
    %c0_25 = arith.constant 0 : index
    %41 = vector.load %arg8[%c0_24, %c0_25] : memref<1x128xf32, #tpu.memory_space<vmem>>, vector<1x128xf32>
    %cst_26 = arith.constant dense<0.000000e+00> : vector<128xf32>
    %42 = vector.multi_reduction <add>, %39, %cst_26 [0] : vector<8x128xf32> to vector<128xf32>
    %43 = vector.shape_cast %42 : vector<128xf32> to vector<1x128xf32>
    %cst_27 = arith.constant 8.000000e+00 : f32
    %44 = vector.broadcast %cst_27 : f32 to vector<1x128xf32>
    %45 = arith.divf %43, %44 : vector<1x128xf32>
    %46 = arith.mulf %39, %39 : vector<8x128xf32>
    %cst_28 = arith.constant dense<0.000000e+00> : vector<128xf32>
    %47 = vector.multi_reduction <add>, %46, %cst_28 [0] : vector<8x128xf32> to vector<128xf32>
    %48 = vector.shape_cast %47 : vector<128xf32> to vector<1x128xf32>
    %cst_29 = arith.constant 8.000000e+00 : f32
    %49 = vector.broadcast %cst_29 : f32 to vector<1x128xf32>
    %50 = arith.divf %48, %49 : vector<1x128xf32>
    %51 = arith.mulf %45, %45 : vector<1x128xf32>
    %52 = arith.subf %50, %51 : vector<1x128xf32>
    %cst_30 = arith.constant 0.000000e+00 : f32
    %53 = vector.broadcast %cst_30 : f32 to vector<1x128xf32>
    %54 = arith.maximumf %52, %53 : vector<1x128xf32>
    %55 = vector.broadcast %45 : vector<1x128xf32> to vector<8x128xf32>
    %56 = arith.subf %39, %55 : vector<8x128xf32>
    %57 = vector.broadcast %40 : vector<1x128xf32> to vector<8x128xf32>
    %58 = arith.mulf %57, %56 : vector<8x128xf32>
    %cst_31 = arith.constant 9.99999974E-6 : f32
    %59 = vector.broadcast %cst_31 : f32 to vector<1x128xf32>
    %60 = arith.addf %54, %59 : vector<1x128xf32>
    %61 = math.rsqrt %60 : vector<1x128xf32>
    %62 = vector.broadcast %61 : vector<1x128xf32> to vector<8x128xf32>
    %63 = arith.mulf %58, %62 : vector<8x128xf32>
    %64 = vector.broadcast %41 : vector<1x128xf32> to vector<8x128xf32>
    %65 = arith.addf %63, %64 : vector<8x128xf32>
    %66 = arith.subf %65, %0 : vector<8x128xf32>
    %67 = arith.mulf %66, %66 : vector<8x128xf32>
    %68 = vector.shape_cast %67 : vector<8x128xf32> to vector<1x8x128xf32>
    %cst_32 = arith.constant dense<0.000000e+00> : vector<1xf32>
    %69 = vector.multi_reduction <add>, %68, %cst_32 [1, 2] : vector<1x8x128xf32> to vector<1xf32>
    %70 = vector.shape_cast %69 : vector<1xf32> to vector<1x1x1xf32>
    %71 = vector.extract %70[0, 0, 0] : f32 from vector<1x1x1xf32>
    %cst_33 = arith.constant 3.906250e-03 : f32
    %72 = arith.mulf %71, %cst_33 : f32
    %73 = vector.broadcast %72 : f32 to vector<1x1xf32>
    %c0_34 = arith.constant 0 : index
    %c0_35 = arith.constant 0 : index
    %74 = vector.load %arg10[%c0_34, %c0_35] : memref<1x1xf32, #tpu.memory_space<vmem>>, vector<1x1xf32>
    tpu.vector_store %arg10[%c0_34, %c0_35], %73 {strides = array<i32>} : memref<1x1xf32, #tpu.memory_space<vmem>>, vector<1x1xf32>,
    return
  }
}

</mosaic_0001>

<llo_original>
// kernel: tpu_custom_call.1
$region0: #{tpu_custom_call.1}
  #allocation0 [shape = 'u32[]', space=smem, size = 0x4, offset = 0x4, fixed_abs, tag = 'smem constant byte address 0x4 - core index']
  #allocation1 [shape = 'u32[144,128]{1,0:T(1,128)}', space=vmem, size = 0x12000, scoped, tag = 'internal scratch']
  %s0 = inlined_call_operand.hbm [shape: f32[8,128], index: 0, kind: input, shape index: {}]
  %s1 = inlined_call_operand.hbm [shape: f32[8,256], index: 1, kind: output, shape index: {}]
  %s2 = sld [smem:[#allocation0]]
  $region41: #{tpu_custom_call.1} parent=0
    _
  %s4 = ssub.s32 1, %s2
  %s5 = scalar_select 0, %s4, %s2
  $region1: #{tpu_custom_call.1} parent=0
    #allocation2 [shape = 'u8[4096]{0}', space=vmem, size = 0x1000, scoped, tag = 'input window, operand 0, single buffered']
    #allocation3 [shape = 's32[2]{0}', space=sflag, size = 0x8, scoped, tag = 'scoped memory for tpu_custom_call.1']
    #allocation4 [shape = 's32[2]{0}', space=sflag, size = 0x8, scoped, tag = 'scoped memory for tpu_custom_call.1']
    #allocation5 [shape = 'u8[8192]{0}', space=vmem, size = 0x2000, scoped, tag = 'output window, operand 0']
    %6 = vsyncpa [#allocation3], 0
    %7 = vsyncpa [#allocation4], 0
    %s8 = scalar_lea.sflag [#allocation4], 1
    %9 = vsyncpa %s8, 0
    loop: start=0, step=1, limit=4
    $region2: #{tpu_custom_call.1} parent=1 // loop_pre_header
      _
    $region3: #{tpu_custom_call.1} parent=1 // loop_header
      %s11 = sphi 0, %s15
      %p12 = scmp.ge.s32.totalorder %s11, 4
      %s19 = sphi 0, %s19
      %s21 = sphi 0, %s19
      %s22 = sphi 0, %s21
      %s36 = sphi 0, %s22
      %s42 = sphi 0, %s44
      %s45 = sphi 0, %s42
      %s46 = sphi 0, %s45
      %s62 = sphi 0, %s46
    $region4: #{tpu_custom_call.1} parent=1 // loop_header_branch
      %14 = sbr.rel (%p12) target = $region8
    $region5: #{tpu_custom_call.1} parent=1 // loop_body
      %s16 = ssub.s32 %s11, 1
      %s17 = ssub.s32 %s11, 2
      %s18 = sadd.s32 %s11, 1
      %s20 = sadd.s32 %s19, 1
      %p23 = scmp.eq.s32.totalorder %s11, 1
      %p24 = scmp.ne.s32.totalorder %s19, %s21
      %p25 = scmp.eq.s32.totalorder %s11, 0
      %p26 = por %p24, %p25
      %p27 = scmp.ne.s32.totalorder %s19, %s21
      %p28 = scmp.eq.s32.totalorder %s16, 1
      %p29 = por %p27, %p28
      %p30 = scmp.ne.s32.totalorder %s21, %s22
      %p31 = scmp.eq.s32.totalorder %s16, 0
      %p32 = por %p30, %p31
      %p33 = scmp.ne.s32.totalorder %s21, %s22
      %p34 = scmp.eq.s32.totalorder %s17, 1
      %p35 = por %p33, %p34
      %p37 = scmp.ne.s32.totalorder %s22, %s36
      %p38 = scmp.eq.s32.totalorder %s17, 0
      %p39 = por %p37, %p38
      %s40 = ssub.s32 %s11, %s18
      %p41 = scmp.eq.s32.totalorder %s40, 0
      %s43 = sadd.s32 %s42, 1
      %s44 = scalar_select %p41, %s42, %s43
      %p47 = pneg %p41
      %p48 = scmp.eq.s32.totalorder %s11, 1
      %p49 = por %p47, %p48
      %p50 = scmp.ne.s32.totalorder %s42, %s45
      %p51 = scmp.eq.s32.totalorder %s11, 0
      %p52 = por %p50, %p51
      %p53 = scmp.ne.s32.totalorder %s42, %s45
      %p54 = scmp.eq.s32.totalorder %s16, 1
      %p55 = por %p53, %p54
      %p56 = scmp.ne.s32.totalorder %s45, %s46
      %p57 = scmp.eq.s32.totalorder %s16, 0
      %p58 = por %p56, %p57
      %p59 = scmp.ne.s32.totalorder %s45, %s46
      %p60 = scmp.eq.s32.totalorder %s17, 1
      %p61 = por %p59, %p60
      %p63 = scmp.ne.s32.totalorder %s46, %s62
      %p64 = scmp.eq.s32.totalorder %s17, 0
      %p65 = por %p63, %p64
      %p66 = scmp.le.s32.totalorder 1, %s11
      %p67 = scmp.lt.s32.totalorder %s11, 3
      %p68 = pnand %p66, %p67
      %p69 = pneg %p68
      // Predicated region
      $region9: #{tpu_custom_call.1} parent=5 // pred_check
        _
      $region10: #{tpu_custom_call.1} parent=5 // pred_check_branch
        %71 = sbr.rel (%p68) target = $region12
      $region11: #{tpu_custom_call.1} parent=5 // pred_region
        %s72 = ssub.s32 %s11, 1
        // Predicated region
        $region13: #{tpu_custom_call.1} parent=11 // pred_check
          %p73 = pneg %p32
        $region14: #{tpu_custom_call.1} parent=11 // pred_check_branch
          %75 = sbr.rel (%p73) target = $region16
        $region15: #{tpu_custom_call.1} parent=11 // pred_region
          %s77 = ssub.s32 128, 128
          %78 = vsyncadd [#allocation3], %s77
          %s80 = sshll.u32 [#allocation2], 4
          %s81 = int_to_ptr.vmem [resolvable:$true] %s80
          %83 = dma.hbm_to_vmem [thread:$0]  %s0, 128, %s81, [#allocation3]
        $region16: #{tpu_custom_call.1} parent=11 // pred_fallthru
          _
      $region12: #{tpu_custom_call.1} parent=5 // pred_fallthru
        _
      %p84 = scmp.lt.s32.totalorder %s11, 2
      // Predicated region
      $region17: #{tpu_custom_call.1} parent=5 // pred_check
        %p85 = pneg %p84
      $region18: #{tpu_custom_call.1} parent=5 // pred_check_branch
        %87 = sbr.rel (%p85) target = $region20
      $region19: #{tpu_custom_call.1} parent=5 // pred_region
        _
      $region20: #{tpu_custom_call.1} parent=5 // pred_fallthru
        _
      %p88 = scmp.le.s32.totalorder 1, %s11
      %p89 = scmp.lt.s32.totalorder %s11, 3
      %p90 = pnand %p88, %p89
      %p91 = pneg %p90
      // Predicated region
      $region21: #{tpu_custom_call.1} parent=5 // pred_check
        _
      $region22: #{tpu_custom_call.1} parent=5 // pred_check_branch
        %93 = sbr.rel (%p90) target = $region24
      $region23: #{tpu_custom_call.1} parent=5 // pred_region
        %s94 = ssub.s32 %s11, 1
        // Predicated region
        $region25: #{tpu_custom_call.1} parent=23 // pred_check
          %p95 = pneg %p32
        $region26: #{tpu_custom_call.1} parent=23 // pred_check_branch
          %97 = sbr.rel (%p95) target = $region28
        $region27: #{tpu_custom_call.1} parent=23 // pred_region
          %98 = dma.done [#allocation3], 128
        $region28: #{tpu_custom_call.1} parent=23 // pred_fallthru
          _
        %p99 = pneg %p32
        %p100 = pneg %p29
        %p101 = pneg %p58
        %p102 = pneg %p55
        %s103 = sand.u32 %s45, 1
        %s104 = scalar_lea.sflag [#allocation4], %s103
        %s105 = sand.u32 %s45, 1
        %s106 = smul.addr %s105, 8
        %s107 = scalar_lea.vmem [#allocation5], %s106
        %v108 = vld [vmem:[#allocation2] sm:$0xff]
        %109 = vst [vmem:[%s107] sm:$0xff] %v108
        %s110 = sand.u32 %s45, 1
        %s111 = scalar_lea.sflag [#allocation4], %s110
        %s112 = sand.u32 %s45, 1
        %s113 = smul.addr %s112, 8
        %s114 = scalar_lea.vmem [#allocation5], %s113
        // Predicated region
        $region29: #{tpu_custom_call.1} parent=23 // pred_check
          %p115 = pneg %p55
        $region30: #{tpu_custom_call.1} parent=23 // pred_check_branch
          %117 = sbr.rel (%p115) target = $region32
        $region31: #{tpu_custom_call.1} parent=23 // pred_region
          %s119 = ssub.s32 128, 128
          %120 = vsyncadd %s111, %s119
          %s121 = smul.addr %s16, 128
          %s122 = scalar_lea.hbm %s1, %s121
          %s124 = sshll.u32 %s114, 4
          %s125 = int_to_ptr.vmem [resolvable:$true] %s124
          %127 = dma.vmem_to_hbm [thread:$0]  %s125, 128, %s122, %s111
        $region32: #{tpu_custom_call.1} parent=23 // pred_fallthru
          _
      $region24: #{tpu_custom_call.1} parent=5 // pred_fallthru
        _
      %p128 = scmp.le.s32.totalorder 2, %s11
      // Predicated region
      $region33: #{tpu_custom_call.1} parent=5 // pred_check
        %p129 = pneg %p128
      $region34: #{tpu_custom_call.1} parent=5 // pred_check_branch
        %131 = sbr.rel (%p129) target = $region36
      $region35: #{tpu_custom_call.1} parent=5 // pred_region
        %s132 = ssub.s32 %s11, 2
        // Predicated region
        $region37: #{tpu_custom_call.1} parent=35 // pred_check
          %p133 = pneg %p61
        $region38: #{tpu_custom_call.1} parent=35 // pred_check_branch
          %135 = sbr.rel (%p133) target = $region40
        $region39: #{tpu_custom_call.1} parent=35 // pred_region
          %s136 = sand.u32 %s46, 1
          %s137 = scalar_lea.sflag [#allocation4], %s136
          %s138 = sand.u32 %s46, 1
          %s139 = smul.addr %s138, 8
          %s140 = scalar_lea.vmem [#allocation5], %s139
          %141 = dma.done %s137, 128
        $region40: #{tpu_custom_call.1} parent=35 // pred_fallthru
          _
      $region36: #{tpu_custom_call.1} parent=5 // pred_fallthru
        _
    $region6: #{tpu_custom_call.1} parent=1 // loop_footer
      %s15 = sadd.s32 1, %s11
    $region7: #{tpu_custom_call.1} parent=1 // loop_footer_branch
      %10 = sbr.rel target = $region3
    $region8: #{tpu_custom_call.1} parent=1 // loop_exit
      _
    %142 = vsyncpa [#allocation3], 1
    %s143 = scalar_lea.sflag [#allocation3], 1
    %144 = vsyncpa %s143, 1
    %145 = vsyncpa [#allocation4], 1
    %s146 = scalar_lea.sflag [#allocation4], 1
    %147 = vsyncpa %s146, 1

// kernel: linear_autoencoder_forward.1
$region0: #{linear_autoencoder_forward.1}
  #allocation0 [shape = 'u32[]', space=smem, size = 0x4, offset = 0x4, fixed_abs, tag = 'smem constant byte address 0x4 - core index']
  #allocation1 [shape = 'u32[144,128]{1,0:T(1,128)}', space=vmem, size = 0x12000, scoped, tag = 'internal scratch']
  %s0 = inlined_call_operand.vmem [shape: f32[8,128], index: 0, kind: input, shape index: {}]
  %s1 = inlined_call_operand.hbm [shape: bf16[128,128], index: 1, kind: input, shape index: {}]
  %s2 = inlined_call_operand.vmem [shape: f32[1,128], index: 2, kind: input, shape index: {}]
  %s3 = inlined_call_operand.vmem [shape: f32[1,128], index: 3, kind: input, shape index: {}]
  %s4 = inlined_call_operand.vmem [shape: f32[1,128], index: 4, kind: input, shape index: {}]
  %s5 = inlined_call_operand.hbm [shape: bf16[128,128], index: 5, kind: input, shape index: {}]
  %s6 = inlined_call_operand.vmem [shape: f32[1,128], index: 6, kind: input, shape index: {}]
  %s7 = inlined_call_operand.vmem [shape: f32[1,128], index: 7, kind: input, shape index: {}]
  %s8 = inlined_call_operand.vmem [shape: f32[1,128], index: 8, kind: input, shape index: {}]
  %s9 = inlined_call_operand.hbm [shape: f32[8,128], index: 9, kind: output, shape index: {0}]
  %s10 = inlined_call_operand.hbm [shape: f32[1,1], index: 10, kind: output, shape index: {1}]
  %11 = xla_tuple %s9, %s10
  %s12 = sld [smem:[#allocation0]]
  $region62: #{linear_autoencoder_forward.1} parent=0
    _
  %s14 = ssub.s32 1, %s12
  %s15 = scalar_select 0, %s14, %s12
  $region1: #{linear_autoencoder_forward.1} parent=0
    #allocation2 [shape = 'u8[32768]{0}', space=vmem, size = 0x8000, scoped, tag = 'input window, operand 1, single buffered']
    #allocation3 [shape = 's32[1]{0}', space=sflag, size = 0x4, scoped, tag = 'scoped memory for linear_autoencoder_forward.1']
    #allocation4 [shape = 's32[1]{0}', space=sflag, size = 0x4, scoped, tag = 'scoped memory for linear_autoencoder_forward.1']
    #allocation5 [shape = 'u8[32768]{0}', space=vmem, size = 0x8000, scoped, tag = 'input window, operand 5, single buffered']
    #allocation6 [shape = 's32[1]{0}', space=sflag, size = 0x4, scoped, tag = 'scoped memory for linear_autoencoder_forward.1']
    #allocation7 [shape = 'u8[4096]{0}', space=vmem, size = 0x1000, scoped, tag = 'output window, operand 0, single buffered']
    #allocation8 [shape = 'u8[512]{0}', space=vmem, size = 0x400, scoped, tag = 'output window, operand 1, single buffered']
    #allocation9 [shape = 's32[1]{0}', space=sflag, size = 0x4, scoped, tag = 'scoped memory for linear_autoencoder_forward.1']
    %16 = vsyncpa [#allocation3], 0
    %17 = vsyncpa [#allocation6], 0
    %18 = vsyncpa [#allocation4], 0
    %19 = vsyncpa [#allocation9], 0
    // Predicated region
    $region2: #{linear_autoencoder_forward.1} parent=1 // pred_check
      _
    $region3: #{linear_autoencoder_forward.1} parent=1 // pred_check_branch
      %21 = sbr.rel (0) target = $region5
    $region4: #{linear_autoencoder_forward.1} parent=1 // pred_region
      _
    $region5: #{linear_autoencoder_forward.1} parent=1 // pred_fallthru
      _
    // Predicated region
    $region6: #{linear_autoencoder_forward.1} parent=1 // pred_check
      _
    $region7: #{linear_autoencoder_forward.1} parent=1 // pred_check_branch
      %23 = sbr.rel (0) target = $region9
    $region8: #{linear_autoencoder_forward.1} parent=1 // pred_region
      %s25 = ssub.s32 1024, 1024
      %26 = vsyncadd [#allocation3], %s25
      %s27 = sshll.u32 [#allocation2], 4
      %s28 = int_to_ptr.vmem [resolvable:$true] %s27
      %33 = dma.hbm_to_vmem [thread:$0]  %s1, 1024, %s28, [#allocation3], 64, 64, 4
    $region9: #{linear_autoencoder_forward.1} parent=1 // pred_fallthru
      _
    // Predicated region
    $region10: #{linear_autoencoder_forward.1} parent=1 // pred_check
      _
    $region11: #{linear_autoencoder_forward.1} parent=1 // pred_check_branch
      %35 = sbr.rel (0) target = $region13
    $region12: #{linear_autoencoder_forward.1} parent=1 // pred_region
      _
    $region13: #{linear_autoencoder_forward.1} parent=1 // pred_fallthru
      _
    // Predicated region
    $region14: #{linear_autoencoder_forward.1} parent=1 // pred_check
      _
    $region15: #{linear_autoencoder_forward.1} parent=1 // pred_check_branch
      %37 = sbr.rel (0) target = $region17
    $region16: #{linear_autoencoder_forward.1} parent=1 // pred_region
      _
    $region17: #{linear_autoencoder_forward.1} parent=1 // pred_fallthru
      _
    // Predicated region
    $region18: #{linear_autoencoder_forward.1} parent=1 // pred_check
      _
    $region19: #{linear_autoencoder_forward.1} parent=1 // pred_check_branch
      %39 = sbr.rel (0) target = $region21
    $region20: #{linear_autoencoder_forward.1} parent=1 // pred_region
      _
    $region21: #{linear_autoencoder_forward.1} parent=1 // pred_fallthru
      _
    // Predicated region
    $region22: #{linear_autoencoder_forward.1} parent=1 // pred_check
      _
    $region23: #{linear_autoencoder_forward.1} parent=1 // pred_check_branch
      %41 = sbr.rel (0) target = $region25
    $region24: #{linear_autoencoder_forward.1} parent=1 // pred_region
      %s43 = ssub.s32 1024, 1024
      %44 = vsyncadd [#allocation6], %s43
      %s45 = sshll.u32 [#allocation5], 4
      %s46 = int_to_ptr.vmem [resolvable:$true] %s45
      %51 = dma.hbm_to_vmem [thread:$0]  %s5, 1024, %s46, [#allocation6], 64, 64, 4
    $region25: #{linear_autoencoder_forward.1} parent=1 // pred_fallthru
      _
    // Predicated region
    $region26: #{linear_autoencoder_forward.1} parent=1 // pred_check
      _
    $region27: #{linear_autoencoder_forward.1} parent=1 // pred_check_branch
      %53 = sbr.rel (0) target = $region29
    $region28: #{linear_autoencoder_forward.1} parent=1 // pred_region
      _
    $region29: #{linear_autoencoder_forward.1} parent=1 // pred_fallthru
      _
    // Predicated region
    $region30: #{linear_autoencoder_forward.1} parent=1 // pred_check
      _
    $region31: #{linear_autoencoder_forward.1} parent=1 // pred_check_branch
      %55 = sbr.rel (0) target = $region33
    $region32: #{linear_autoencoder_forward.1} parent=1 // pred_region
      _
    $region33: #{linear_autoencoder_forward.1} parent=1 // pred_fallthru
      _
    // Predicated region
    $region34: #{linear_autoencoder_forward.1} parent=1 // pred_check
      _
    $region35: #{linear_autoencoder_forward.1} parent=1 // pred_check_branch
      %57 = sbr.rel (0) target = $region37
    $region36: #{linear_autoencoder_forward.1} parent=1 // pred_region
      _
    $region37: #{linear_autoencoder_forward.1} parent=1 // pred_fallthru
      _
    // Predicated region
    $region38: #{linear_autoencoder_forward.1} parent=1 // pred_check
      _
    $region39: #{linear_autoencoder_forward.1} parent=1 // pred_check_branch
      %59 = sbr.rel (0) target = $region41
    $region40: #{linear_autoencoder_forward.1} parent=1 // pred_region
      %60 = dma.done [#allocation3], 1024
    $region41: #{linear_autoencoder_forward.1} parent=1 // pred_fallthru
      _
    // Predicated region
    $region42: #{linear_autoencoder_forward.1} parent=1 // pred_check
      _
    $region43: #{linear_autoencoder_forward.1} parent=1 // pred_check_branch
      %62 = sbr.rel (0) target = $region45
    $region44: #{linear_autoencoder_forward.1} parent=1 // pred_region
      %63 = dma.done [#allocation6], 1024
    $region45: #{linear_autoencoder_forward.1} parent=1 // pred_fallthru
      _
    %v65 = vld [vmem:[%s0] sm:$0xff]
    %v66 = vpack.c.bf16 %v65, %v65
    %v67 = vld [vmem:[#allocation2] sm:$0xf]
    %v68 = vld [vmem:[#allocation2 + $0x4] sm:$0xf]
    %v69 = vld [vmem:[#allocation2 + $0x8] sm:$0xf]
    %v70 = vld [vmem:[#allocation2 + $0xc] sm:$0xf]
    %v71 = vld [vmem:[#allocation2 + $0x10] sm:$0xf]
    %v72 = vld [vmem:[#allocation2 + $0x14] sm:$0xf]
    %v73 = vld [vmem:[#allocation2 + $0x18] sm:$0xf]
    %v74 = vld [vmem:[#allocation2 + $0x1c] sm:$0xf]
    %v75 = vld [vmem:[#allocation2 + $0x20] sm:$0xf]
    %v76 = vld [vmem:[#allocation2 + $0x24] sm:$0xf]
    %v77 = vld [vmem:[#allocation2 + $0x28] sm:$0xf]
    %v78 = vld [vmem:[#allocation2 + $0x2c] sm:$0xf]
    %v79 = vld [vmem:[#allocation2 + $0x30] sm:$0xf]
    %v80 = vld [vmem:[#allocation2 + $0x34] sm:$0xf]
    %v81 = vld [vmem:[#allocation2 + $0x38] sm:$0xf]
    %v82 = vld [vmem:[#allocation2 + $0x3c] sm:$0xf]
    %v83 = vld [vmem:[%s2] sm:$0x1]
    %v85 = vlaneseq
    %v86 = vshrl.u32 %v85, 7
    %v87 = vsub.s32 0, %v86
    %v88 = vrot.slane %v83, %v87
    %v106 = vunpack.c.l.b16 %v67
    %v107 = vunpack.c.l.b16 %v68
    %v108 = vunpack.c.l.b16 %v69
    %v109 = vunpack.c.l.b16 %v70
    %v110 = vunpack.c.l.b16 %v71
    %v111 = vunpack.c.l.b16 %v72
    %v112 = vunpack.c.l.b16 %v73
    %v113 = vunpack.c.l.b16 %v74
    %v114 = vunpack.c.l.b16 %v75
    %v115 = vunpack.c.l.b16 %v76
    %v116 = vunpack.c.l.b16 %v77
    %v117 = vunpack.c.l.b16 %v78
    %v118 = vunpack.c.l.b16 %v79
    %v119 = vunpack.c.l.b16 %v80
    %v120 = vunpack.c.l.b16 %v81
    %v121 = vunpack.c.l.b16 %v82
    %v122 = vpack.c.b16 %v107, %v106
    %v123 = vpack.c.b16 %v109, %v108
    %v124 = vpack.c.b16 %v111, %v110
    %v125 = vpack.c.b16 %v113, %v112
    %v126 = vpack.c.b16 %v115, %v114
    %v127 = vpack.c.b16 %v117, %v116
    %v128 = vpack.c.b16 %v119, %v118
    %v129 = vpack.c.b16 %v121, %v120
    %138 = vmatprep.subr.bf16.mxu0 0
    %139 = vmatpush1.bf16.msra.mxu0 %v122
    %140 = vmatprep.subr.bf16.mxu0 0
    %141 = vmatpush1.bf16.msra.mxu0 %v123
    %142 = vmatprep.subr.bf16.mxu0 0
    %143 = vmatpush1.bf16.msra.mxu0 %v124
    %144 = vmatprep.subr.bf16.mxu0 0
    %145 = vmatpush1.bf16.msra.mxu0 %v125
    %146 = vmatprep.subr.bf16.mxu0 0
    %147 = vmatpush1.bf16.msra.mxu0 %v126
    %148 = vmatprep.subr.bf16.mxu0 0
    %149 = vmatpush1.bf16.msra.mxu0 %v127
    %150 = vmatprep.subr.bf16.mxu0 0
    %151 = vmatpush1.bf16.msra.mxu0 %v128
    %152 = vmatprep.subr.bf16.mxu0 0
    %153 = vmatpush1.bf16.msra.mxu0 %v129
    %154 = vmatprep.subr.bf16.mxu0 0
    %155 = vmatpush1.bf16.msra.mxu0 0
    %156 = vmatprep.subr.bf16.mxu0 0
    %157 = vmatpush1.bf16.msra.mxu0 0
    %158 = vmatprep.subr.bf16.mxu0 0
    %159 = vmatpush1.bf16.msra.mxu0 0
    %160 = vmatprep.subr.bf16.mxu0 0
    %161 = vmatpush1.bf16.msra.mxu0 0
    %162 = vmatprep.subr.bf16.mxu0 0
    %163 = vmatpush1.bf16.msra.mxu0 0
    %164 = vmatprep.subr.bf16.mxu0 0
    %165 = vmatpush1.bf16.msra.mxu0 0
    %166 = vmatprep.subr.bf16.mxu0 0
    %167 = vmatpush1.bf16.msra.mxu0 0
    %168 = vmatprep.subr.bf16.mxu0 0
    %169 = vmatpush1.bf16.msra.mxu0 0
    %170 = vmatprep.mubr.bf16.mxu0 0
    %171 = vmatmul.mubr.bf16.gmra.mrb[0].mxu0 %v66
    %v172 = vpop.f32.mrb[0].mxu0
    %v173 = vadd.f32 %v88, %v172
    %v174 = vpop.f32.mrb[0].mxu0
    %v175 = vpop.f32.mrb[0].mxu0
    %v176 = vpop.f32.mrb[0].mxu0
    %177 = vdwg.mxu0
    %v178 = vld [vmem:[%s3] sm:$0x1]
    %v179 = vld [vmem:[%s4] sm:$0x1]
    %v180 = vrot.slane %v173, 4
    %v181 = vadd.f32 %v173, %v180
    %v182 = vrot.slane %v181, 2
    %v183 = vadd.f32 %v181, %v182
    %v184 = vrot.slane %v183, 1
    %v185 = vadd.f32 %v183, %v184
    %v186 = vrcp.pop 8.0
    %v187 = vmul.f32 %v185, %v186
    %v188 = vmul.f32 %v173, %v173
    %v189 = vrot.slane %v188, 4
    %v190 = vadd.f32 %v188, %v189
    %v191 = vrot.slane %v190, 2
    %v192 = vadd.f32 %v190, %v191
    %v193 = vrot.slane %v192, 1
    %v194 = vadd.f32 %v192, %v193
    %v195 = vmul.f32 %v194, %v186
    %v196 = vmul.f32 %v187, %v187
    %v197 = vsub.f32 %v195, %v196
    %v198 = vmax.f32 %v197, 0.0
    %v199 = vsub.f32 %v173, %v187
    %v201 = vlaneseq
    %v202 = vshrl.u32 %v201, 7
    %v203 = vsub.s32 0, %v202
    %v204 = vrot.slane %v178, %v203
    %v206 = vmul.f32 %v204, %v199
    %v207 = vadd.f32 %v198, 1e-05
    %v208 = vrsqrt.pop %v207
    %v209 = vmul.f32 %v206, %v208
    %v211 = vlaneseq
    %v212 = vshrl.u32 %v211, 7
    %v213 = vsub.s32 0, %v212
    %v214 = vrot.slane %v179, %v213
    %v216 = vadd.f32 %v209, %v214
    %217 = vst [vmem:[#allocation7] sm:$0xff] %v216
    %v218 = vpack.c.bf16 %v216, %v216
    %v219 = vld [vmem:[#allocation5] sm:$0xf]
    %v220 = vld [vmem:[#allocation5 + $0x4] sm:$0xf]
    %v221 = vld [vmem:[#allocation5 + $0x8] sm:$0xf]
    %v222 = vld [vmem:[#allocation5 + $0xc] sm:$0xf]
    %v223 = vld [vmem:[#allocation5 + $0x10] sm:$0xf]
    %v224 = vld [vmem:[#allocation5 + $0x14] sm:$0xf]
    %v225 = vld [vmem:[#allocation5 + $0x18] sm:$0xf]
    %v226 = vld [vmem:[#allocation5 + $0x1c] sm:$0xf]
    %v227 = vld [vmem:[#allocation5 + $0x20] sm:$0xf]
    %v228 = vld [vmem:[#allocation5 + $0x24] sm:$0xf]
    %v229 = vld [vmem:[#allocation5 + $0x28] sm:$0xf]
    %v230 = vld [vmem:[#allocation5 + $0x2c] sm:$0xf]
    %v231 = vld [vmem:[#allocation5 + $0x30] sm:$0xf]
    %v232 = vld [vmem:[#allocation5 + $0x34] sm:$0xf]
    %v233 = vld [vmem:[#allocation5 + $0x38] sm:$0xf]
    %v234 = vld [vmem:[#allocation5 + $0x3c] sm:$0xf]
    %v235 = vld [vmem:[%s6] sm:$0x1]
    %v237 = vlaneseq
    %v238 = vshrl.u32 %v237, 7
    %v239 = vsub.s32 0, %v238
    %v240 = vrot.slane %v235, %v239
    %v258 = vunpack.c.l.b16 %v219
    %v259 = vunpack.c.l.b16 %v220
    %v260 = vunpack.c.l.b16 %v221
    %v261 = vunpack.c.l.b16 %v222
    %v262 = vunpack.c.l.b16 %v223
    %v263 = vunpack.c.l.b16 %v224
    %v264 = vunpack.c.l.b16 %v225
    %v265 = vunpack.c.l.b16 %v226
    %v266 = vunpack.c.l.b16 %v227
    %v267 = vunpack.c.l.b16 %v228
    %v268 = vunpack.c.l.b16 %v229
    %v269 = vunpack.c.l.b16 %v230
    %v270 = vunpack.c.l.b16 %v231
    %v271 = vunpack.c.l.b16 %v232
    %v272 = vunpack.c.l.b16 %v233
    %v273 = vunpack.c.l.b16 %v234
    %v274 = vpack.c.b16 %v259, %v258
    %v275 = vpack.c.b16 %v261, %v260
    %v276 = vpack.c.b16 %v263, %v262
    %v277 = vpack.c.b16 %v265, %v264
    %v278 = vpack.c.b16 %v267, %v266
    %v279 = vpack.c.b16 %v269, %v268
    %v280 = vpack.c.b16 %v271, %v270
    %v281 = vpack.c.b16 %v273, %v272
    %290 = vmatprep.subr.bf16.mxu0 0
    %291 = vmatpush1.bf16.msra.mxu0 %v274
    %292 = vmatprep.subr.bf16.mxu0 0
    %293 = vmatpush1.bf16.msra.mxu0 %v275
    %294 = vmatprep.subr.bf16.mxu0 0
    %295 = vmatpush1.bf16.msra.mxu0 %v276
    %296 = vmatprep.subr.bf16.mxu0 0
    %297 = vmatpush1.bf16.msra.mxu0 %v277
    %298 = vmatprep.subr.bf16.mxu0 0
    %299 = vmatpush1.bf16.msra.mxu0 %v278
    %300 = vmatprep.subr.bf16.mxu0 0
    %301 = vmatpush1.bf16.msra.mxu0 %v279
    %302 = vmatprep.subr.bf16.mxu0 0
    %303 = vmatpush1.bf16.msra.mxu0 %v280
    %304 = vmatprep.subr.bf16.mxu0 0
    %305 = vmatpush1.bf16.msra.mxu0 %v281
    %306 = vmatprep.subr.bf16.mxu0 0
    %307 = vmatpush1.bf16.msra.mxu0 0
    %308 = vmatprep.subr.bf16.mxu0 0
    %309 = vmatpush1.bf16.msra.mxu0 0
    %310 = vmatprep.subr.bf16.mxu0 0
    %311 = vmatpush1.bf16.msra.mxu0 0
    %312 = vmatprep.subr.bf16.mxu0 0
    %313 = vmatpush1.bf16.msra.mxu0 0
    %314 = vmatprep.subr.bf16.mxu0 0
    %315 = vmatpush1.bf16.msra.mxu0 0
    %316 = vmatprep.subr.bf16.mxu0 0
    %317 = vmatpush1.bf16.msra.mxu0 0
    %318 = vmatprep.subr.bf16.mxu0 0
    %319 = vmatpush1.bf16.msra.mxu0 0
    %320 = vmatprep.subr.bf16.mxu0 0
    %321 = vmatpush1.bf16.msra.mxu0 0
    %322 = vmatprep.mubr.bf16.mxu0 0
    %323 = vmatmul.mubr.bf16.gmra.mrb[0].mxu0 %v218
    %v324 = vpop.f32.mrb[0].mxu0
    %v325 = vadd.f32 %v240, %v324
    %v326 = vpop.f32.mrb[0].mxu0
    %v327 = vpop.f32.mrb[0].mxu0
    %v328 = vpop.f32.mrb[0].mxu0
    %329 = vdwg.mxu0
    %v330 = vld [vmem:[%s7] sm:$0x1]
    %v331 = vld [vmem:[%s8] sm:$0x1]
    %v332 = vrot.slane %v325, 4
    %v333 = vadd.f32 %v325, %v332
    %v334 = vrot.slane %v333, 2
    %v335 = vadd.f32 %v333, %v334
    %v336 = vrot.slane %v335, 1
    %v337 = vadd.f32 %v335, %v336
    %v338 = vmul.f32 %v337, %v186
    %v339 = vmul.f32 %v325, %v325
    %v340 = vrot.slane %v339, 4
    %v341 = vadd.f32 %v339, %v340
    %v342 = vrot.slane %v341, 2
    %v343 = vadd.f32 %v341, %v342
    %v344 = vrot.slane %v343, 1
    %v345 = vadd.f32 %v343, %v344
    %v346 = vmul.f32 %v345, %v186
    %v347 = vmul.f32 %v338, %v338
    %v348 = vsub.f32 %v346, %v347
    %v349 = vmax.f32 %v348, 0.0
    %v350 = vsub.f32 %v325, %v338
    %v352 = vlaneseq
    %v353 = vshrl.u32 %v352, 7
    %v354 = vsub.s32 0, %v353
    %v355 = vrot.slane %v330, %v354
    %v357 = vmul.f32 %v355, %v350
    %v358 = vadd.f32 %v349, 1e-05
    %v359 = vrsqrt.pop %v358
    %v360 = vmul.f32 %v357, %v359
    %v362 = vlaneseq
    %v363 = vshrl.u32 %v362, 7
    %v364 = vsub.s32 0, %v363
    %v365 = vrot.slane %v331, %v364
    %v367 = vadd.f32 %v360, %v365
    %v368 = vsub.f32 %v367, %v65
    %v369 = vmul.f32 %v368, %v368
    %370 = vadd.xlane.f32.xlu0 %v369
    %v371 = vpop.xlane.xlu0 %370
    %v372 = vrot.slane %v371, 4
    %v373 = vadd.f32 %v371, %v372
    %v374 = vrot.slane %v373, 2
    %v375 = vadd.f32 %v373, %v374
    %v376 = vrot.slane %v375, 1
    %v377 = vadd.f32 %v375, %v376
    %s378 = vtos %v377
    %s379 = smul.f32 %s378, 0.00390625
    %v380 = vstv %s379
    %vm381 = vcmask 0
    %382 = vst.msk [vmem:[#allocation8] sm:$0x1] %vm381, %v380
    // Predicated region
    $region46: #{linear_autoencoder_forward.1} parent=1 // pred_check
      _
    $region47: #{linear_autoencoder_forward.1} parent=1 // pred_check_branch
      %384 = sbr.rel (0) target = $region49
    $region48: #{linear_autoencoder_forward.1} parent=1 // pred_region
      %s386 = ssub.s32 128, 128
      %387 = vsyncadd [#allocation4], %s386
      %s389 = sshll.u32 [#allocation7], 4
      %s390 = int_to_ptr.vmem [resolvable:$true] %s389
      %392 = dma.vmem_to_hbm [thread:$0]  %s390, 128, %s9, [#allocation4]
    $region49: #{linear_autoencoder_forward.1} parent=1 // pred_fallthru
      _
    // Predicated region
    $region50: #{linear_autoencoder_forward.1} parent=1 // pred_check
      _
    $region51: #{linear_autoencoder_forward.1} parent=1 // pred_check_branch
      %394 = sbr.rel (0) target = $region53
    $region52: #{linear_autoencoder_forward.1} parent=1 // pred_region
      %s396 = ssub.s32 16, 16
      %397 = vsyncadd [#allocation9], %s396
      %s399 = sshll.u32 [#allocation8], 4
      %s400 = int_to_ptr.vmem [resolvable:$true] %s399
      %402 = dma.vmem_to_hbm [thread:$0]  %s400, 16, %s10, [#allocation9]
    $region53: #{linear_autoencoder_forward.1} parent=1 // pred_fallthru
      _
    // Predicated region
    $region54: #{linear_autoencoder_forward.1} parent=1 // pred_check
      _
    $region55: #{linear_autoencoder_forward.1} parent=1 // pred_check_branch
      %404 = sbr.rel (0) target = $region57
    $region56: #{linear_autoencoder_forward.1} parent=1 // pred_region
      %405 = dma.done [#allocation4], 128
    $region57: #{linear_autoencoder_forward.1} parent=1 // pred_fallthru
      _
    // Predicated region
    $region58: #{linear_autoencoder_forward.1} parent=1 // pred_check
      _
    $region59: #{linear_autoencoder_forward.1} parent=1 // pred_check_branch
      %407 = sbr.rel (0) target = $region61
    $region60: #{linear_autoencoder_forward.1} parent=1 // pred_region
      %408 = dma.done [#allocation9], 16
    $region61: #{linear_autoencoder_forward.1} parent=1 // pred_fallthru
      _
    %409 = vsyncpa [#allocation3], 1
    %410 = vsyncpa [#allocation6], 1
    %411 = vsyncpa [#allocation4], 1
    %412 = vsyncpa [#allocation9], 1

</llo_original>
